<compile_context>
chip_gen: v7x
topology: tpu7x:2x2x1
jax: 0.10.0
libtpu: 0.0.40
codegen_flags: <defaults>
</compile_context>

<pallas_src>
import functools

import jax
import jax.numpy as jnp
from jax.experimental import pallas as pl
from jax.experimental.pallas import tpu as pltpu


_VMEM_LIMIT_BYTES = 48 * 1024 * 1024   # fits v5e/v6e (128 MiB) and v7x (64 MiB)
_MAX_ROW_TILE = 512                    # multiple of 8   (sublane tile)
_MAX_COL_TILE = 512                    # multiple of 128 (lane tile)


def _compiler_params(n_grid_axes):
    return pltpu.CompilerParams(
        dimension_semantics=("parallel",) * n_grid_axes,
        vmem_limit_bytes=_VMEM_LIMIT_BYTES,
    )


def _row_tile(m):
    # full extent (always a legal block) when small, else a 8-aligned cap;
    # grids use pl.cdiv so a ragged last tile is handled by masked stores.
    return m if m <= _MAX_ROW_TILE else _MAX_ROW_TILE


def _col_tile(n):
    return n if n <= _MAX_COL_TILE else _MAX_COL_TILE


# --------------------------------------------------------------------------
# Fused LayerNorm prologue + Linear (+ optional GELU epilogue)
#   y = LN(x) @ W + b        [optionally gelu(y)]
# LN statistics are computed in f32; the normalized activation is cast to the
# weight dtype (bf16-friendly MXU feed), accumulation stays f32.
# --------------------------------------------------------------------------
def _ln_linear_kernel(x_ref, g_ref, bln_ref, w_ref, b_ref, o_ref, *, activation):
    x = x_ref[...].astype(jnp.float32)                       # (tm, K)
    mean = jnp.mean(x, axis=-1, keepdims=True)
    xc = x - mean
    var = jnp.mean(xc * xc, axis=-1, keepdims=True)
    xn = xc * jax.lax.rsqrt(var + 1e-5)
    xn = xn * g_ref[...] + bln_ref[...]                      # f32
    acc = jnp.dot(xn.astype(w_ref.dtype), w_ref[...],
                  preferred_element_type=jnp.float32)        # (tm, tn)
    acc = acc + b_ref[...]
    if activation == "gelu":
        acc = jax.nn.gelu(acc, approximate=True)
    o_ref[...] = acc.astype(o_ref.dtype)


def ln_linear_pallas(x2d, gamma, beta, w, b, activation=None):
    m, k = x2d.shape
    k2, n = w.shape
    assert k == k2
    tm, tn = _row_tile(m), _col_tile(n)
    grid = (pl.cdiv(m, tm), pl.cdiv(n, tn))
    kern = functools.partial(_ln_linear_kernel, activation=activation)
    return pl.pallas_call(
        kern,
        out_shape=jax.ShapeDtypeStruct((m, n), x2d.dtype),
        grid=grid,
        in_specs=[
            pl.BlockSpec((tm, k), lambda i, j: (i, 0)),      # activation tile
            pl.BlockSpec((1, k), lambda i, j: (0, 0)),       # LN gamma
            pl.BlockSpec((1, k), lambda i, j: (0, 0)),       # LN beta
            pl.BlockSpec((k, tn), lambda i, j: (0, j)),      # weight panel
            pl.BlockSpec((1, tn), lambda i, j: (0, j)),      # bias
        ],
        out_specs=pl.BlockSpec((tm, tn), lambda i, j: (i, j)),
        compiler_params=_compiler_params(2),
    )(x2d,
      gamma.reshape(1, k).astype(jnp.float32),
      beta.reshape(1, k).astype(jnp.float32),
      w,
      b.reshape(1, n).astype(jnp.float32))


# --------------------------------------------------------------------------
# Fused Linear + residual/DropPath epilogue:
#   out = resid + s[row] * (y @ W + b)
# --------------------------------------------------------------------------
def _linear_residual_kernel(y_ref, w_ref, b_ref, r_ref, s_ref, o_ref):
    acc = jnp.dot(y_ref[...], w_ref[...], preferred_element_type=jnp.float32)
    acc = acc + b_ref[...]
    out = r_ref[...].astype(jnp.float32) + s_ref[...] * acc
    o_ref[...] = out.astype(o_ref.dtype)


def linear_residual_pallas(y2d, w, b, resid2d, row_scale):
    m, k = y2d.shape
    k2, n = w.shape
    assert k == k2 and resid2d.shape == (m, n)
    tm, tn = _row_tile(m), _col_tile(n)
    grid = (pl.cdiv(m, tm), pl.cdiv(n, tn))
    return pl.pallas_call(
        _linear_residual_kernel,
        out_shape=jax.ShapeDtypeStruct((m, n), resid2d.dtype),
        grid=grid,
        in_specs=[
            pl.BlockSpec((tm, k), lambda i, j: (i, 0)),      # branch activation
            pl.BlockSpec((k, tn), lambda i, j: (0, j)),      # weight panel
            pl.BlockSpec((1, tn), lambda i, j: (0, j)),      # bias
            pl.BlockSpec((tm, tn), lambda i, j: (i, j)),     # residual stream
            pl.BlockSpec((tm, 1), lambda i, j: (i, 0)),      # DropPath scale
        ],
        out_specs=pl.BlockSpec((tm, tn), lambda i, j: (i, j)),
        compiler_params=_compiler_params(2),
    )(y2d, w, b.reshape(1, n).astype(jnp.float32), resid2d,
      row_scale.astype(jnp.float32))


# --------------------------------------------------------------------------
# Attention core: per batch element, all heads in one grid step.
# Reads the lane-dense (N, 3D) QKV tile (columns: [q | k | v], each D wide
# with head h occupying columns h*hd:(h+1)*hd) and writes a lane-dense (N, D)
# output -> no XLA transposes before/after.
# --------------------------------------------------------------------------
def _attention_kernel(qkv_ref, o_ref, *, num_heads, head_dim, scale):
    qkv = qkv_ref[...]                                       # (N, 3D), input dtype
    d = num_heads * head_dim
    outs = []
    for h in range(num_heads):                               # static unroll
        lo = h * head_dim
        q = qkv[:, lo:lo + head_dim]
        k = qkv[:, d + lo:d + lo + head_dim]
        v = qkv[:, 2 * d + lo:2 * d + lo + head_dim]
        s = jax.lax.dot_general(q, k, (((1,), (1,)), ((), ())),
                                preferred_element_type=jnp.float32) * scale
        s = s - jnp.max(s, axis=-1, keepdims=True)
        p = jnp.exp(s)
        inv = pl.reciprocal(jnp.sum(p, axis=-1, keepdims=True))   # EUP, exact
        p = p * inv
        outs.append(jnp.dot(p.astype(v.dtype), v,
                            preferred_element_type=jnp.float32))
    o_ref[...] = jnp.concatenate(outs, axis=-1).astype(o_ref.dtype)


def attention_pallas(qkv2d, batch, seq, dim, num_heads, scale):
    hd = dim // num_heads
    qkv3 = qkv2d.reshape(batch, seq, 3 * dim)                # free view
    kern = functools.partial(_attention_kernel, num_heads=num_heads,
                             head_dim=hd, scale=scale)
    out = pl.pallas_call(
        kern,
        out_shape=jax.ShapeDtypeStruct((batch, seq, dim), qkv2d.dtype),
        grid=(batch,),
        in_specs=[pl.BlockSpec((None, seq, 3 * dim), lambda b: (b, 0, 0))],
        out_specs=pl.BlockSpec((None, seq, dim), lambda b: (b, 0, 0)),
        compiler_params=_compiler_params(1),
    )(qkv3)
    return out.reshape(batch * seq, dim)                     # free view


# --------------------------------------------------------------------------
# DropPath per-sample scale (RNG glue in plain JAX; fused into the matmul
# epilogue, so it costs no extra HBM pass of the activation tensor).
# --------------------------------------------------------------------------
def _droppath_row_scale(key, batch, seq, drop_prob, training):
    if drop_prob == 0.0 or not training or key is None:
        scale = jnp.ones((batch,), jnp.float32)
    else:
        keep = 1.0 - drop_prob
        u = jax.random.uniform(key, (batch,), dtype=jnp.float32)
        scale = jnp.floor(keep + u) / jnp.float32(keep)      # 0 or 1/keep_prob
    return jnp.repeat(scale, seq)[:, None]                   # (batch*seq, 1)


# --------------------------------------------------------------------------
# Block (forward only)
# --------------------------------------------------------------------------
class BlockPallas:
    def __init__(self, dim, num_heads, mlp_ratio=4.0, qkv_bias=False,
                 qk_scale=None, drop=0.0, attn_drop=0.0, drop_path=0.0, *,
                 key, param_dtype=jnp.float32):
        assert dim % num_heads == 0
        self.dim = dim
        self.num_heads = num_heads
        self.head_dim = dim // num_heads
        self.scale = qk_scale or self.head_dim ** (-0.5)
        self.drop_path_prob = float(drop_path)
        hidden = int(dim * mlp_ratio)

        ks = jax.random.split(key, 12)
        init = lambda k, shape: 0.02 * jax.random.normal(k, shape, jnp.float32)
        wd = param_dtype                                      # weight storage dtype
        self.params = dict(
            g1=jnp.ones((dim,), jnp.float32) + init(ks[0], (dim,)),
            b1=init(ks[1], (dim,)),
            g2=jnp.ones((dim,), jnp.float32) + init(ks[2], (dim,)),
            b2=init(ks[3], (dim,)),
            w_qkv=init(ks[4], (dim, 3 * dim)).astype(wd),
            b_qkv=(init(ks[5], (3 * dim,)) if qkv_bias
                   else jnp.zeros((3 * dim,), jnp.float32)),
            w_proj=init(ks[6], (dim, dim)).astype(wd),
            b_proj=init(ks[7], (dim,)),
            w_fc1=init(ks[8], (dim, hidden)).astype(wd),
            b_fc1=init(ks[9], (hidden,)),
            w_fc2=init(ks[10], (hidden, dim)).astype(wd),
            b_fc2=init(ks[11], (dim,)),
        )

    def __call__(self, x, key=None, training=True):
        B, N, D = x.shape
        p = self.params

        k1 = k2 = None
        if self.drop_path_prob > 0.0 and training:
            assert key is not None, "need a PRNG key for DropPath in training"
            k1, k2 = jax.random.split(key)
        s1 = _droppath_row_scale(k1, B, N, self.drop_path_prob, training)
        s2 = _droppath_row_scale(k2, B, N, self.drop_path_prob, training)

        x2 = x.reshape(B * N, D)                              # lane-dense layout

        # ---- attention branch (LN1 fused into QKV; residual fused into proj)
        qkv = ln_linear_pallas(x2, p["g1"], p["b1"], p["w_qkv"], p["b_qkv"])
        y = attention_pallas(qkv, B, N, D, self.num_heads, self.scale)
        x2 = linear_residual_pallas(y, p["w_proj"], p["b_proj"], x2, s1)

        # ---- MLP branch (LN2 fused into fc1+GELU; residual fused into fc2)
        h = ln_linear_pallas(x2, p["g2"], p["b2"], p["w_fc1"], p["b_fc1"],
                             activation="gelu")
        x2 = linear_residual_pallas(h, p["w_fc2"], p["b_fc2"], x2, s2)

        return x2.reshape(B, N, D)


# --------------------------------------------------------------------------
# Pure-JAX reference (same weights, same RNG usage, same GELU approximation)
# --------------------------------------------------------------------------
def _reference_block(params, x, key, *, num_heads, qk_scale,
                     drop_path_prob, training):
    B, N, D = x.shape
    hd = D // num_heads

    def ln(z, g, b):
        m = jnp.mean(z, axis=-1, keepdims=True)
        zc = z - m
        var = jnp.mean(zc * zc, axis=-1, keepdims=True)
        return zc * jax.lax.rsqrt(var + 1e-5) * g + b

    if drop_path_prob > 0.0 and training and key is not None:
        k1, k2 = jax.random.split(key)
        keep = 1.0 - drop_path_prob
        s1 = jnp.floor(keep + jax.random.uniform(k1, (B,), dtype=jnp.float32)) \
            / jnp.float32(keep)
        s2 = jnp.floor(keep + jax.random.uniform(k2, (B,), dtype=jnp.float32)) \
            / jnp.float32(keep)
    else:
        s1 = s2 = jnp.ones((B,), jnp.float32)

    h = ln(x, params["g1"], params["b1"])
    qkv = h @ params["w_qkv"] + params["b_qkv"]
    qkv = qkv.reshape(B, N, 3, num_heads, hd).transpose(2, 0, 3, 1, 4)
    q, k, v = qkv[0], qkv[1], qkv[2]
    attn = jnp.einsum("bhnd,bhmd->bhnm", q, k) * qk_scale
    attn = jax.nn.softmax(attn, axis=-1)
    y = jnp.einsum("bhnm,bhmd->bhnd", attn, v)
    y = y.transpose(0, 2, 1, 3).reshape(B, N, D)
    y = y @ params["w_proj"] + params["b_proj"]
    x = x + s1[:, None, None] * y

    h = ln(x, params["g2"], params["b2"])
    h = jax.nn.gelu(h @ params["w_fc1"] + params["b_fc1"], approximate=True)
    y = h @ params["w_fc2"] + params["b_fc2"]
    x = x + s2[:, None, None] * y
    return x


if __name__ == "__main__":
    root = jax.random.PRNGKey(0)
    k_init, k_x, k_drop = jax.random.split(root, 3)

    # Small ViT-block-like shapes: batch=2, seq=8, hidden=32, heads=4
    B, N, D, H = 2, 8, 32, 4
    blk = BlockPallas(dim=D, num_heads=H, mlp_ratio=4.0, qkv_bias=True,
                      drop_path=0.3, key=k_init)
    x = jax.random.normal(k_x, (B, N, D), dtype=jnp.float32)

    # Training path (exercises the fused DropPath residual epilogue).
    out = jax.block_until_ready(blk(x, key=k_drop, training=True))
    ref = _reference_block(blk.params, x, k_drop, num_heads=H,
                           qk_scale=blk.scale,
                           drop_path_prob=blk.drop_path_prob, training=True)
    assert out.shape == x.shape and out.dtype == x.dtype
    err = float(jnp.max(jnp.abs(out - ref)))
    assert jnp.allclose(out, ref, atol=1e-2, rtol=1e-2), f"train mismatch {err}"

    # Eval path (DropPath is identity; kernels still run with scale=1).
    out_eval = jax.block_until_ready(blk(x, key=k_drop, training=False))
    ref_eval = _reference_block(blk.params, x, k_drop, num_heads=H,
                                qk_scale=blk.scale,
                                drop_path_prob=blk.drop_path_prob,
                                training=False)
    err_e = float(jnp.max(jnp.abs(out_eval - ref_eval)))
    assert jnp.allclose(out_eval, ref_eval, atol=1e-2, rtol=1e-2), \
        f"eval mismatch {err_e}"

    # bf16 smoke run: native bf16 MXU operands (weights + activations),
    # f32 accumulation / softmax statistics inside the kernels.
    blk_bf16 = BlockPallas(dim=D, num_heads=H, mlp_ratio=4.0, qkv_bias=True,
                           drop_path=0.3, key=k_init,
                           param_dtype=jnp.bfloat16)
    out_bf16 = jax.block_until_ready(
        blk_bf16(x.astype(jnp.bfloat16), key=k_drop, training=True))
    assert out_bf16.shape == x.shape and out_bf16.dtype == jnp.bfloat16
    assert bool(jnp.all(jnp.isfinite(out_bf16.astype(jnp.float32))))

    print("KERNEL_OK")
</pallas_src>

<mosaic_0001>
module attributes {stable_mosaic.version = 11 : i64} {
  func.func @_ln_linear_kernel(%arg0: i32, %arg1: i32, %arg2: memref<16x32xf32, #tpu.memory_space<vmem>>, %arg3: memref<1x32xf32, #tpu.memory_space<vmem>>, %arg4: memref<1x32xf32, #tpu.memory_space<vmem>>, %arg5: memref<32x96xf32, #tpu.memory_space<vmem>>, %arg6: memref<1x96xf32, #tpu.memory_space<vmem>>, %arg7: memref<16x96xf32, #tpu.memory_space<vmem>>) attributes {dimension_semantics = [#tpu.dimension_semantics<parallel>, #tpu.dimension_semantics<parallel>], iteration_bounds = array<i64: 1, 1>, scalar_prefetch = 0 : i64, scratch_operands = 0 : i64, tpu.core_type = #tpu.core_type<tc>, window_params = [{transform_indices = @transform_0, window_bounds = array<i64: 16, 32>}, {pipeline_mode = #tpu.pipeline_mode<synchronous>, transform_indices = @transform_1, window_bounds = array<i64: 1, 32>}, {pipeline_mode = #tpu.pipeline_mode<synchronous>, transform_indices = @transform_2, window_bounds = array<i64: 1, 32>}, {transform_indices = @transform_3, window_bounds = array<i64: 32, 96>}, {transform_indices = @transform_4, window_bounds = array<i64: 1, 96>}, {transform_indices = @transform_5, window_bounds = array<i64: 16, 96>}]} {
    %c0 = arith.constant 0 : index
    %c0_0 = arith.constant 0 : index
    %0 = vector.load %arg2[%c0, %c0_0] : memref<16x32xf32, #tpu.memory_space<vmem>>, vector<16x32xf32>
    %cst = arith.constant dense<0.000000e+00> : vector<16xf32>
    %1 = vector.multi_reduction <add>, %0, %cst [1] : vector<16x32xf32> to vector<16xf32>
    %2 = vector.shape_cast %1 : vector<16xf32> to vector<16x1xf32>
    %cst_1 = arith.constant 3.200000e+01 : f32
    %3 = vector.broadcast %cst_1 : f32 to vector<16x1xf32>
    %4 = arith.divf %2, %3 : vector<16x1xf32>
    %5 = vector.broadcast %4 : vector<16x1xf32> to vector<16x32xf32>
    %6 = arith.subf %0, %5 : vector<16x32xf32>
    %7 = arith.mulf %6, %6 : vector<16x32xf32>
    %cst_2 = arith.constant dense<0.000000e+00> : vector<16xf32>
    %8 = vector.multi_reduction <add>, %7, %cst_2 [1] : vector<16x32xf32> to vector<16xf32>
    %9 = vector.shape_cast %8 : vector<16xf32> to vector<16x1xf32>
    %cst_3 = arith.constant 3.200000e+01 : f32
    %10 = vector.broadcast %cst_3 : f32 to vector<16x1xf32>
    %11 = arith.divf %9, %10 : vector<16x1xf32>
    %cst_4 = arith.constant 9.99999974E-6 : f32
    %12 = vector.broadcast %cst_4 : f32 to vector<16x1xf32>
    %13 = arith.addf %11, %12 : vector<16x1xf32>
    %14 = math.rsqrt %13 : vector<16x1xf32>
    %15 = vector.broadcast %14 : vector<16x1xf32> to vector<16x32xf32>
    %16 = arith.mulf %6, %15 : vector<16x32xf32>
    %c0_5 = arith.constant 0 : index
    %c0_6 = arith.constant 0 : index
    %17 = vector.load %arg3[%c0_5, %c0_6] : memref<1x32xf32, #tpu.memory_space<vmem>>, vector<1x32xf32>
    %18 = vector.broadcast %17 : vector<1x32xf32> to vector<16x32xf32>
    %19 = arith.mulf %16, %18 : vector<16x32xf32>
    %c0_7 = arith.constant 0 : index
    %c0_8 = arith.constant 0 : index
    %20 = vector.load %arg4[%c0_7, %c0_8] : memref<1x32xf32, #tpu.memory_space<vmem>>, vector<1x32xf32>
    %21 = vector.broadcast %20 : vector<1x32xf32> to vector<16x32xf32>
    %22 = arith.addf %19, %21 : vector<16x32xf32>
    %c0_9 = arith.constant 0 : index
    %c0_10 = arith.constant 0 : index
    %23 = vector.load %arg5[%c0_9, %c0_10] : memref<32x96xf32, #tpu.memory_space<vmem>>, vector<32x96xf32>
    %cst_11 = arith.constant dense<0.000000e+00> : vector<16x96xf32>
    %24 = tpu.matmul %22, %23, %cst_11 {dimension_numbers = #tpu.dot_dimension_numbers<[1], [0], [0], [1], [0, 0, 1, 1], [], []>} : vector<16x32xf32>, vector<32x96xf32>, vector<16x96xf32> -> vector<16x96xf32>
    %c0_12 = arith.constant 0 : index
    %c0_13 = arith.constant 0 : index
    %25 = vector.load %arg6[%c0_12, %c0_13] : memref<1x96xf32, #tpu.memory_space<vmem>>, vector<1x96xf32>
    %26 = vector.broadcast %25 : vector<1x96xf32> to vector<16x96xf32>
    %27 = arith.addf %24, %26 : vector<16x96xf32>
    %c0_14 = arith.constant 0 : index
    %c0_15 = arith.constant 0 : index
    %28 = vector.load %arg7[%c0_14, %c0_15] : memref<16x96xf32, #tpu.memory_space<vmem>>, vector<16x96xf32>
    tpu.vector_store %arg7[%c0_14, %c0_15], %27 {strides = array<i32>} : memref<16x96xf32, #tpu.memory_space<vmem>>, vector<16x96xf32>,
    return
  }
  func.func @transform_0(%arg0: i32, %arg1: i32) -> (i32, i32) {
    %c0_i32 = arith.constant 0 : i32
    %c0_i32_0 = arith.constant 0 : i32
    return %arg0, %c0_i32 : i32, i32
  }
  func.func @transform_1(%arg0: i32, %arg1: i32) -> (i32, i32) {
    %c0_i32 = arith.constant 0 : i32
    %c0_i32_0 = arith.constant 0 : i32
    %c0_i32_1 = arith.constant 0 : i32
    return %c0_i32, %c0_i32_0 : i32, i32
  }
  func.func @transform_2(%arg0: i32, %arg1: i32) -> (i32, i32) {
    %c0_i32 = arith.constant 0 : i32
    %c0_i32_0 = arith.constant 0 : i32
    %c0_i32_1 = arith.constant 0 : i32
    return %c0_i32, %c0_i32_0 : i32, i32
  }
  func.func @transform_3(%arg0: i32, %arg1: i32) -> (i32, i32) {
    %c0_i32 = arith.constant 0 : i32
    %c0_i32_0 = arith.constant 0 : i32
    return %c0_i32, %arg1 : i32, i32
  }
  func.func @transform_4(%arg0: i32, %arg1: i32) -> (i32, i32) {
    %c0_i32 = arith.constant 0 : i32
    %c0_i32_0 = arith.constant 0 : i32
    return %c0_i32, %arg1 : i32, i32
  }
  func.func @transform_5(%arg0: i32, %arg1: i32) -> (i32, i32) {
    %c0_i32 = arith.constant 0 : i32
    return %arg0, %arg1 : i32, i32
  }
}

</mosaic_0001>

<llo_original>
// kernel: tpu_custom_call.1
$region0: #{tpu_custom_call.1}
  #allocation0 [shape = 'u32[]', space=smem, size = 0x4, offset = 0x4, fixed_abs, tag = 'smem constant byte address 0x4 - core index']
  #allocation1 [shape = 'u32[144,128]{1,0:T(1,128)}', space=vmem, size = 0x12000, scoped, tag = 'internal scratch']
  %s0 = inlined_call_operand.hbm [shape: f32[16,32], index: 0, kind: input, shape index: {}]
  %s1 = inlined_call_operand.vmem [shape: f32[1,32], index: 1, kind: input, shape index: {}]
  %s2 = inlined_call_operand.vmem [shape: f32[1,32], index: 2, kind: input, shape index: {}]
  %s3 = inlined_call_operand.hbm [shape: f32[32,96], index: 3, kind: input, shape index: {}]
  %s4 = inlined_call_operand.vmem [shape: f32[1,96], index: 4, kind: input, shape index: {}]
  %s5 = inlined_call_operand.hbm [shape: f32[16,96], index: 5, kind: output, shape index: {}]
  %s6 = sld [smem:[#allocation0]]
  $region38: #{tpu_custom_call.1} parent=0
    _
  %s8 = ssub.s32 1, %s6
  %s9 = scalar_select 0, %s8, %s6
  $region1: #{tpu_custom_call.1} parent=0
    #allocation2 [shape = 'u8[8192]{0}', space=vmem, size = 0x2000, scoped, tag = 'input window, operand 0, single buffered']
    #allocation3 [shape = 's32[1]{0}', space=sflag, size = 0x4, scoped, tag = 'scoped memory for tpu_custom_call.1']
    #allocation4 [shape = 's32[1]{0}', space=sflag, size = 0x4, scoped, tag = 'scoped memory for tpu_custom_call.1']
    #allocation5 [shape = 'u8[16384]{0}', space=vmem, size = 0x4000, scoped, tag = 'input window, operand 3, single buffered']
    #allocation6 [shape = 's32[1]{0}', space=sflag, size = 0x4, scoped, tag = 'scoped memory for tpu_custom_call.1']
    #allocation7 [shape = 'u8[8192]{0}', space=vmem, size = 0x2000, scoped, tag = 'output window, operand 0, single buffered']
    %10 = vsyncpa [#allocation3], 0
    %11 = vsyncpa [#allocation6], 0
    %12 = vsyncpa [#allocation4], 0
    // Predicated region
    $region2: #{tpu_custom_call.1} parent=1 // pred_check
      _
    $region3: #{tpu_custom_call.1} parent=1 // pred_check_branch
      %14 = sbr.rel (0) target = $region5
    $region4: #{tpu_custom_call.1} parent=1 // pred_region
      %s16 = ssub.s32 256, 256
      %17 = vsyncadd [#allocation3], %s16
      %s18 = sshll.u32 [#allocation2], 4
      %s19 = int_to_ptr.vmem [resolvable:$true] %s18
      %24 = dma.hbm_to_vmem [thread:$0]  %s0, 256, %s19, [#allocation3], 128, 128, 8
    $region5: #{tpu_custom_call.1} parent=1 // pred_fallthru
      _
    // Predicated region
    $region6: #{tpu_custom_call.1} parent=1 // pred_check
      _
    $region7: #{tpu_custom_call.1} parent=1 // pred_check_branch
      %26 = sbr.rel (0) target = $region9
    $region8: #{tpu_custom_call.1} parent=1 // pred_region
      _
    $region9: #{tpu_custom_call.1} parent=1 // pred_fallthru
      _
    // Predicated region
    $region10: #{tpu_custom_call.1} parent=1 // pred_check
      _
    $region11: #{tpu_custom_call.1} parent=1 // pred_check_branch
      %28 = sbr.rel (0) target = $region13
    $region12: #{tpu_custom_call.1} parent=1 // pred_region
      _
    $region13: #{tpu_custom_call.1} parent=1 // pred_fallthru
      _
    // Predicated region
    $region14: #{tpu_custom_call.1} parent=1 // pred_check
      _
    $region15: #{tpu_custom_call.1} parent=1 // pred_check_branch
      %30 = sbr.rel (0) target = $region17
    $region16: #{tpu_custom_call.1} parent=1 // pred_region
      %s32 = ssub.s32 512, 512
      %33 = vsyncadd [#allocation6], %s32
      %s34 = sshll.u32 [#allocation5], 4
      %s35 = int_to_ptr.vmem [resolvable:$true] %s34
      %40 = dma.hbm_to_vmem [thread:$0]  %s3, 512, %s35, [#allocation6], 128, 128, 8
    $region17: #{tpu_custom_call.1} parent=1 // pred_fallthru
      _
    // Predicated region
    $region18: #{tpu_custom_call.1} parent=1 // pred_check
      _
    $region19: #{tpu_custom_call.1} parent=1 // pred_check_branch
      %42 = sbr.rel (0) target = $region21
    $region20: #{tpu_custom_call.1} parent=1 // pred_region
      _
    $region21: #{tpu_custom_call.1} parent=1 // pred_fallthru
      _
    // Predicated region
    $region22: #{tpu_custom_call.1} parent=1 // pred_check
      _
    $region23: #{tpu_custom_call.1} parent=1 // pred_check_branch
      %44 = sbr.rel (0) target = $region25
    $region24: #{tpu_custom_call.1} parent=1 // pred_region
      %45 = dma.done [#allocation3], 256
    $region25: #{tpu_custom_call.1} parent=1 // pred_fallthru
      _
    // Predicated region
    $region26: #{tpu_custom_call.1} parent=1 // pred_check
      _
    $region27: #{tpu_custom_call.1} parent=1 // pred_check_branch
      %47 = sbr.rel (0) target = $region29
    $region28: #{tpu_custom_call.1} parent=1 // pred_region
      %48 = dma.done [#allocation6], 512
    $region29: #{tpu_custom_call.1} parent=1 // pred_fallthru
      _
    %v49 = vld [vmem:[#allocation2] sm:$0xff]
    %v50 = vld [vmem:[#allocation2 + $0x8] sm:$0xff]
    %vm51 = vcmask 261120
    %v52 = vsel %vm51, %v49, 0.0
    %53 = vadd.xlane.f32.xlu0 %v52
    %v54 = vpop.xlane.xlu0 %53
    %v55 = vsel %vm51, %v50, 0.0
    %56 = vadd.xlane.f32.xlu0 %v55
    %v57 = vpop.xlane.xlu0 %56
    %v58 = vrcp.pop 32.0
    %v59 = vmul.f32 %v54, %v58
    %v60 = vmul.f32 %v57, %v58
    %v61 = vsub.f32 %v49, %v59
    %v62 = vsub.f32 %v50, %v60
    %v63 = vmul.f32 %v61, %v61
    %v64 = vmul.f32 %v62, %v62
    %v65 = vsel %vm51, %v63, 0.0
    %66 = vadd.xlane.f32.xlu0 %v65
    %v67 = vpop.xlane.xlu0 %66
    %v68 = vsel %vm51, %v64, 0.0
    %69 = vadd.xlane.f32.xlu0 %v68
    %v70 = vpop.xlane.xlu0 %69
    %v71 = vmul.f32 %v67, %v58
    %v72 = vmul.f32 %v70, %v58
    %v73 = vadd.f32 %v71, 1e-05
    %v74 = vadd.f32 %v72, 1e-05
    %v75 = vrsqrt.pop %v73
    %v76 = vrsqrt.pop %v74
    %v77 = vmul.f32 %v61, %v75
    %v78 = vmul.f32 %v62, %v76
    %v79 = vld [vmem:[%s1] sm:$0x1]
    %v81 = vlaneseq
    %v82 = vshrl.u32 %v81, 7
    %v83 = vsub.s32 0, %v82
    %v84 = vrot.slane %v79, %v83
    %v86 = vmul.f32 %v77, %v84
    %v87 = vmul.f32 %v78, %v84
    %v88 = vld [vmem:[%s2] sm:$0x1]
    %v90 = vlaneseq
    %v91 = vshrl.u32 %v90, 7
    %v92 = vsub.s32 0, %v91
    %v93 = vrot.slane %v88, %v92
    %v95 = vadd.f32 %v86, %v93
    %v96 = vadd.f32 %v87, %v93
    %v97 = vld [vmem:[#allocation5] sm:$0xff]
    %v98 = vld [vmem:[#allocation5 + $0x8] sm:$0xff]
    %v99 = vld [vmem:[#allocation5 + $0x10] sm:$0xff]
    %v100 = vld [vmem:[#allocation5 + $0x18] sm:$0xff]
    %v101 = vld [vmem:[%s4] sm:$0x1]
    %v103 = vlaneseq
    %v104 = vshrl.u32 %v103, 7
    %v105 = vsub.s32 0, %v104
    %v106 = vrot.slane %v101, %v105
    %v109 = vsel %vm51, %v95, 0
    %v112 = vsel %vm51, %v96, 0
    %114 = vmatprep.subr.mxu0 0.0
    %115 = vmatpush1.msra.mxu0 %v97
    %116 = vmatprep.subr.mxu0 0.0
    %117 = vmatpush1.msra.mxu0 %v98
    %118 = vmatprep.subr.mxu0 0.0
    %119 = vmatpush1.msra.mxu0 %v99
    %120 = vmatprep.subr.mxu0 0.0
    %121 = vmatpush1.msra.mxu0 %v100
    %122 = vmatprep.subr.mxu0 0.0
    %123 = vmatpush1.msra.mxu0 0.0
    %124 = vmatprep.subr.mxu0 0.0
    %125 = vmatpush1.msra.mxu0 0.0
    %126 = vmatprep.subr.mxu0 0.0
    %127 = vmatpush1.msra.mxu0 0.0
    %128 = vmatprep.subr.mxu0 0.0
    %129 = vmatpush1.msra.mxu0 0.0
    %130 = vmatprep.subr.mxu0 0.0
    %131 = vmatpush1.msra.mxu0 0.0
    %132 = vmatprep.subr.mxu0 0.0
    %133 = vmatpush1.msra.mxu0 0.0
    %134 = vmatprep.subr.mxu0 0.0
    %135 = vmatpush1.msra.mxu0 0.0
    %136 = vmatprep.subr.mxu0 0.0
    %137 = vmatpush1.msra.mxu0 0.0
    %138 = vmatprep.subr.mxu0 0.0
    %139 = vmatpush1.msra.mxu0 0.0
    %140 = vmatprep.subr.mxu0 0.0
    %141 = vmatpush1.msra.mxu0 0.0
    %142 = vmatprep.subr.mxu0 0.0
    %143 = vmatpush1.msra.mxu0 0.0
    %144 = vmatprep.subr.mxu0 0.0
    %145 = vmatpush1.msra.mxu0 0.0
    %146 = vmatprep.subr.mxu0 0.0
    %147 = vmatpush1.msra.mxu0 0.0
    %148 = vmatprep.subr.mxu0 0.0
    %149 = vmatpush1.msra.mxu0 0.0
    %150 = vmatprep.subr.mxu0 0.0
    %151 = vmatpush1.msra.mxu0 0.0
    %152 = vmatprep.subr.mxu0 0.0
    %153 = vmatpush1.msra.mxu0 0.0
    %154 = vmatprep.subr.mxu0 0.0
    %155 = vmatpush1.msra.mxu0 0.0
    %156 = vmatprep.subr.mxu0 0.0
    %157 = vmatpush1.msra.mxu0 0.0
    %158 = vmatprep.subr.mxu0 0.0
    %159 = vmatpush1.msra.mxu0 0.0
    %160 = vmatprep.subr.mxu0 0.0
    %161 = vmatpush1.msra.mxu0 0.0
    %162 = vmatprep.subr.mxu0 0.0
    %163 = vmatpush1.msra.mxu0 0.0
    %164 = vmatprep.subr.mxu0 0.0
    %165 = vmatpush1.msra.mxu0 0.0
    %166 = vmatprep.subr.mxu0 0.0
    %167 = vmatpush1.msra.mxu0 0.0
    %168 = vmatprep.subr.mxu0 0.0
    %169 = vmatpush1.msra.mxu0 0.0
    %170 = vmatprep.subr.mxu0 0.0
    %171 = vmatpush1.msra.mxu0 0.0
    %172 = vmatprep.subr.mxu0 0.0
    %173 = vmatpush1.msra.mxu0 0.0
    %174 = vmatprep.subr.mxu0 0.0
    %175 = vmatpush1.msra.mxu0 0.0
    %176 = vmatprep.subr.mxu0 0.0
    %177 = vmatpush1.msra.mxu0 0.0
    %178 = vmatprep.mubr.f32.mxu0 0.0
    %179 = vmatmul.mubr.f32.gmra.mrb[0].mxu0 %v109
    %v180 = vpop.f32.mrb[0].mxu0
    %v181 = vadd.f32 %v106, %v180
    %v182 = vpop.f32.mrb[0].mxu0
    %183 = vmatprep.mubr.f32.mxu0 0.0
    %184 = vmatmul.mubr.f32.gmra.mrb[0].mxu0 %v112
    %v185 = vpop.f32.mrb[0].mxu0
    %v186 = vadd.f32 %v106, %v185
    %v187 = vpop.f32.mrb[0].mxu0
    %188 = vdwg.mxu0
    %vm189 = vcmask 785408
    %190 = vst.msk [vmem:[#allocation7] sm:$0xff] %vm189, %v181
    %191 = vst.msk [vmem:[#allocation7 + $0x8] sm:$0xff] %vm189, %v186
    // Predicated region
    $region30: #{tpu_custom_call.1} parent=1 // pred_check
      _
    $region31: #{tpu_custom_call.1} parent=1 // pred_check_branch
      %193 = sbr.rel (0) target = $region33
    $region32: #{tpu_custom_call.1} parent=1 // pred_region
      %s195 = ssub.s32 256, 256
      %196 = vsyncadd [#allocation4], %s195
      %s197 = sshll.u32 [#allocation7], 4
      %s198 = int_to_ptr.vmem [resolvable:$true] %s197
      %203 = dma.vmem_to_hbm [thread:$0]  %s198, 256, %s5, [#allocation4], 128, 128, 8
    $region33: #{tpu_custom_call.1} parent=1 // pred_fallthru
      _
    // Predicated region
    $region34: #{tpu_custom_call.1} parent=1 // pred_check
      _
    $region35: #{tpu_custom_call.1} parent=1 // pred_check_branch
      %205 = sbr.rel (0) target = $region37
    $region36: #{tpu_custom_call.1} parent=1 // pred_region
      %206 = dma.done [#allocation4], 256
    $region37: #{tpu_custom_call.1} parent=1 // pred_fallthru
      _
    %207 = vsyncpa [#allocation3], 1
    %208 = vsyncpa [#allocation6], 1
    %209 = vsyncpa [#allocation4], 1

</llo_original>
